<compile_context>
chip_gen: v5e
topology: v5e:2x2
jax: 0.10.0
libtpu: 0.0.40
codegen_flags: <defaults>
</compile_context>

<pallas_src>
import functools

import jax
import jax.numpy as jnp
from jax.experimental import pallas as pl
from jax.experimental.pallas import tpu as pltpu


def _round_up(x: int, m: int) -> int:
    return (x + m - 1) // m * m


def _pick_tile(n: int) -> int:
    # 256-aligned tiles keep the v6e/v7x 2x256x256 MXU fed; 128 (v5e MXU native, minimum
    # lane-aligned block) avoids excessive padding for small graphs. Sized so the bf16
    # A tile + X slice + W + f32 acc comfortably fit v7x's 32 MiB scoped VMEM default.
    return 256 if n >= 512 else 128


# ----------------------------------------------------------------------------
# Pallas kernel: one fused, tiled GCN layer   out = relu(A_hat @ (X @ W) + b)
# ----------------------------------------------------------------------------
def _gcn_layer_kernel(a_ref, x_ref, w_ref, b_ref, o_ref, acc_ref):
    k = pl.program_id(1)

    @pl.when(k == 0)
    def _init():
        acc_ref[...] = jnp.zeros_like(acc_ref)

    # K-slice of X @ W (bf16 operands, f32 accumulation on the MXU).
    xw = jnp.dot(x_ref[...], w_ref[...], preferred_element_type=jnp.float32)
    # A row/col tile @ XW slice -> accumulate into the f32 scratch.
    acc_ref[...] += jnp.dot(
        a_ref[...], xw.astype(jnp.bfloat16), preferred_element_type=jnp.float32
    )

    @pl.when(k == pl.num_programs(1) - 1)
    def _finalize():
        # Bias add + ReLU in f32 (no bf16 VPU on v5e), then cast to the output dtype.
        h = acc_ref[...] + b_ref[...]
        # TODO(synk): plumb through arbitrary activations (e.g. PReLU); ReLU hardcoded.
        o_ref[...] = jnp.maximum(h, 0.0).astype(o_ref.dtype)


def gcn_layer(a_hat: jax.Array, x: jax.Array, w: jax.Array, b: jax.Array,
              *, tm: int, tk: int) -> jax.Array:
    """One GCNConv layer + ReLU. Inputs must already be tile/lane aligned (see encoder_forward)."""
    n_pad = a_hat.shape[0]
    f_in = x.shape[1]
    f_out = w.shape[1]
    assert n_pad % tm == 0 and n_pad % tk == 0
    assert f_in % 128 == 0 and f_out % 128 == 0
    b2d = b.reshape(1, f_out).astype(jnp.float32)

    grid = (n_pad // tm, n_pad // tk)
    return pl.pallas_call(
        _gcn_layer_kernel,
        out_shape=jax.ShapeDtypeStruct((n_pad, f_out), jnp.float32),
        grid_spec=pltpu.PrefetchScalarGridSpec(
            num_scalar_prefetch=0,
            grid=grid,
            in_specs=[
                pl.BlockSpec((tm, tk), lambda i, k: (i, k)),        # A_hat tile   (bf16)
                pl.BlockSpec((tk, f_in), lambda i, k: (k, 0)),      # X K-slice    (bf16)
                pl.BlockSpec((f_in, f_out), lambda i, k: (0, 0)),   # W, resident  (bf16)
                pl.BlockSpec((1, f_out), lambda i, k: (0, 0)),      # bias, resident (f32, lane-dense)
            ],
            out_specs=pl.BlockSpec((tm, f_out), lambda i, k: (i, 0)),
            scratch_shapes=[pltpu.VMEM((tm, f_out), jnp.float32)],
        ),
        compiler_params=pltpu.CompilerParams(
            dimension_semantics=("parallel", "arbitrary"),
            vmem_limit_bytes=32 * 1024 * 1024,
        ),
    )(a_hat, x, w, b2d)


# ----------------------------------------------------------------------------
# Glue: dense symmetric-normalized adjacency (PyG GCNConv gcn_norm semantics)
# ----------------------------------------------------------------------------
def build_norm_adj(edge_index: jax.Array, num_nodes: int) -> jax.Array:
    # NOTE: duplicate edges are deduplicated by .set(); PyG's gcn_norm scatter-adds
    # edge weights, so repeated edges in a multigraph would normalize differently.
    src = edge_index[0]
    dst = edge_index[1]
    a = jnp.zeros((num_nodes, num_nodes), jnp.float32)
    a = a.at[dst, src].set(1.0)  # message src -> dst (aggregate at dst rows)
    a = jnp.maximum(a, jnp.eye(num_nodes, dtype=jnp.float32))  # add self-loops
    deg = a.sum(axis=1)
    d_inv_sqrt = jnp.where(deg > 0.0, 1.0 / jnp.sqrt(deg), 0.0)
    return d_inv_sqrt[:, None] * a * d_inv_sqrt[None, :]


# ----------------------------------------------------------------------------
# Encoder: k stacked GCN layers (k=2 default), mirrors the PyTorch module
# ----------------------------------------------------------------------------
def init_encoder_params(key, in_channels: int, out_channels: int, k: int = 2):
    assert k >= 2
    dims = [in_channels] + [2 * out_channels] * (k - 1) + [out_channels]
    params = []
    for i in range(k):
        key, wkey = jax.random.split(key)
        fan_in, fan_out = dims[i], dims[i + 1]
        limit = jnp.sqrt(6.0 / (fan_in + fan_out))  # Glorot-uniform like PyG GCNConv init
        w = jax.random.uniform(wkey, (fan_in, fan_out), jnp.float32, -limit, limit)
        b = jnp.zeros((fan_out,), jnp.float32)
        params.append((w, b))
    return params


@functools.partial(jax.jit, static_argnames=("num_nodes",))
def encoder_forward(params, x: jax.Array, edge_index: jax.Array, num_nodes: int):
    n = num_nodes
    tile = _pick_tile(n)
    n_pad = _round_up(n, tile)

    # Dense symmetric-normalized adjacency, zero-padded and cast to bf16 (halves HBM
    # bytes of the dominant N x N operand; padded rows/cols are zero so they never
    # contribute to the un-padded region).
    a_hat = build_norm_adj(edge_index, n)
    a_pad = jnp.zeros((n_pad, n_pad), jnp.float32).at[:n, :n].set(a_hat)
    a_pad = a_pad.astype(jnp.bfloat16)

    f_in = x.shape[1]
    f_in_pad = _round_up(f_in, 128)
    h_bf16 = (
        jnp.zeros((n_pad, f_in_pad), jnp.float32).at[:n, :f_in].set(x).astype(jnp.bfloat16)
    )

    # TODO(synk): for graphs where A_hat fits VMEM, fuse both layers into one pallas_call
    # to read A_hat from HBM once; for large sparse graphs, switch to a blocked-sparse
    # formulation (scalar-prefetched block-nonzero table) to skip empty A tiles.
    h_f32 = None
    for (w, b) in params:
        fi, fo = w.shape
        fi_pad, fo_pad = _round_up(fi, 128), _round_up(fo, 128)
        w_pad = (
            jnp.zeros((fi_pad, fo_pad), jnp.float32).at[:fi, :fo].set(w).astype(jnp.bfloat16)
        )
        b_pad = jnp.zeros((fo_pad,), jnp.float32).at[:fo].set(b)
        h_f32 = gcn_layer(a_pad, h_bf16, w_pad, b_pad, tm=tile, tk=tile)
        h_bf16 = h_f32.astype(jnp.bfloat16)  # feed next layer in bf16

    out_channels = params[-1][0].shape[1]
    return h_f32[:n, :out_channels]


# ----------------------------------------------------------------------------
# Demo / smoke test
# ----------------------------------------------------------------------------
if __name__ == "__main__":
    key = jax.random.PRNGKey(0)

    num_nodes = 16
    in_channels = 8
    out_channels = 16  # hidden = 2 * out_channels = 32
    k = 2
    num_edges = 32

    key, xkey, ekey, pkey = jax.random.split(key, 4)
    x = jax.random.normal(xkey, (num_nodes, in_channels), jnp.float32)
    edge_index = jax.random.randint(ekey, (2, num_edges), 0, num_nodes, jnp.int32)

    params = init_encoder_params(pkey, in_channels, out_channels, k=k)

    out = encoder_forward(params, x, edge_index, num_nodes)
    out = jax.block_until_ready(out)

    assert out.shape == (num_nodes, out_channels), out.shape
    assert out.dtype == jnp.float32

    # Pure-JAX reference of the same math (same bf16 operand casts, f32 accumulation).
    a_ref = build_norm_adj(edge_index, num_nodes).astype(jnp.bfloat16)
    h = x.astype(jnp.bfloat16)
    hf = None
    for (w, b) in params:
        xw = jnp.dot(h, w.astype(jnp.bfloat16), preferred_element_type=jnp.float32)
        hf = jnp.dot(a_ref, xw.astype(jnp.bfloat16), preferred_element_type=jnp.float32)
        hf = jnp.maximum(hf + b[None, :], 0.0)
        h = hf.astype(jnp.bfloat16)
    ref = hf

    assert jnp.allclose(out, ref, atol=2e-3, rtol=2e-3), float(jnp.max(jnp.abs(out - ref)))

    print("KERNEL_OK")
</pallas_src>

<mosaic_0001>
module attributes {stable_mosaic.version = 11 : i64} {
  func.func @_gcn_layer_kernel(%arg0: i32, %arg1: i32, %arg2: memref<128x128xbf16, #tpu.memory_space<vmem>>, %arg3: memref<128x128xbf16, #tpu.memory_space<vmem>>, %arg4: memref<128x128xbf16, #tpu.memory_space<vmem>>, %arg5: memref<1x128xf32, #tpu.memory_space<vmem>>, %arg6: memref<128x128xf32, #tpu.memory_space<vmem>>, %arg7: memref<128x128xf32, #tpu.memory_space<vmem>>) attributes {dimension_semantics = [#tpu.dimension_semantics<parallel>, #tpu.dimension_semantics<arbitrary>], iteration_bounds = array<i64: 1, 1>, scalar_prefetch = 0 : i64, scratch_operands = 1 : i64, tpu.core_type = #tpu.core_type<tc>, window_params = [{transform_indices = @transform_0, window_bounds = array<i64: 128, 128>}, {transform_indices = @transform_1, window_bounds = array<i64: 128, 128>}, {pipeline_mode = #tpu.pipeline_mode<synchronous>, transform_indices = @transform_2, window_bounds = array<i64: 128, 128>}, {pipeline_mode = #tpu.pipeline_mode<synchronous>, transform_indices = @transform_3, window_bounds = array<i64: 1, 128>}, {transform_indices = @transform_4, window_bounds = array<i64: 128, 128>}]} {
    %c0_i32 = arith.constant 0 : i32
    %0 = arith.cmpi eq, %arg1, %c0_i32 : i32
    %1 = arith.extui %0 : i1 to i32
    %c0_i32_0 = arith.constant 0 : i32
    %2 = arith.cmpi ne, %1, %c0_i32_0 : i32
    scf.if %2 {
      %cst_13 = arith.constant 0.000000e+00 : f32
      %15 = vector.broadcast %cst_13 : f32 to vector<128x128xf32>
      %c0_14 = arith.constant 0 : index
      %c0_15 = arith.constant 0 : index
      %16 = vector.load %arg7[%c0_14, %c0_15] : memref<128x128xf32, #tpu.memory_space<vmem>>, vector<128x128xf32>
      tpu.vector_store %arg7[%c0_14, %c0_15], %15 {strides = array<i32>} : memref<128x128xf32, #tpu.memory_space<vmem>>, vector<128x128xf32>,
    } else {
    }
    %c0 = arith.constant 0 : index
    %c0_1 = arith.constant 0 : index
    %3 = vector.load %arg3[%c0, %c0_1] : memref<128x128xbf16, #tpu.memory_space<vmem>>, vector<128x128xbf16>
    %c0_2 = arith.constant 0 : index
    %c0_3 = arith.constant 0 : index
    %4 = vector.load %arg4[%c0_2, %c0_3] : memref<128x128xbf16, #tpu.memory_space<vmem>>, vector<128x128xbf16>
    %cst = arith.constant dense<0.000000e+00> : vector<128x128xf32>
    %5 = tpu.matmul %3, %4, %cst {dimension_numbers = #tpu.dot_dimension_numbers<[1], [0], [0], [1], [0, 0, 1, 1], [], []>} : vector<128x128xbf16>, vector<128x128xbf16>, vector<128x128xf32> -> vector<128x128xf32>
    %c0_4 = arith.constant 0 : index
    %c0_5 = arith.constant 0 : index
    %6 = vector.load %arg7[%c0_4, %c0_5] : memref<128x128xf32, #tpu.memory_space<vmem>>, vector<128x128xf32>
    %c0_6 = arith.constant 0 : index
    %c0_7 = arith.constant 0 : index
    %7 = vector.load %arg2[%c0_6, %c0_7] : memref<128x128xbf16, #tpu.memory_space<vmem>>, vector<128x128xbf16>
    %8 = arith.truncf %5 : vector<128x128xf32> to vector<128x128xbf16>
    %cst_8 = arith.constant dense<0.000000e+00> : vector<128x128xf32>
    %9 = tpu.matmul %7, %8, %cst_8 {dimension_numbers = #tpu.dot_dimension_numbers<[1], [0], [0], [1], [0, 0, 1, 1], [], []>} : vector<128x128xbf16>, vector<128x128xbf16>, vector<128x128xf32> -> vector<128x128xf32>
    %10 = arith.addf %6, %9 : vector<128x128xf32>
    %c0_9 = arith.constant 0 : index
    %c0_10 = arith.constant 0 : index
    %11 = vector.load %arg7[%c0_9, %c0_10] : memref<128x128xf32, #tpu.memory_space<vmem>>, vector<128x128xf32>
    tpu.vector_store %arg7[%c0_9, %c0_10], %10 {strides = array<i32>} : memref<128x128xf32, #tpu.memory_space<vmem>>, vector<128x128xf32>,
    %c0_i32_11 = arith.constant 0 : i32
    %12 = arith.cmpi eq, %arg1, %c0_i32_11 : i32
    %13 = arith.extui %12 : i1 to i32
    %c0_i32_12 = arith.constant 0 : i32
    %14 = arith.cmpi ne, %13, %c0_i32_12 : i32
    scf.if %14 {
      %c0_13 = arith.constant 0 : index
      %c0_14 = arith.constant 0 : index
      %15 = vector.load %arg7[%c0_13, %c0_14] : memref<128x128xf32, #tpu.memory_space<vmem>>, vector<128x128xf32>
      %c0_15 = arith.constant 0 : index
      %c0_16 = arith.constant 0 : index
      %16 = vector.load %arg5[%c0_15, %c0_16] : memref<1x128xf32, #tpu.memory_space<vmem>>, vector<1x128xf32>
      %17 = vector.broadcast %16 : vector<1x128xf32> to vector<128x128xf32>
      %18 = arith.addf %15, %17 : vector<128x128xf32>
      %cst_17 = arith.constant 0.000000e+00 : f32
      %19 = vector.broadcast %cst_17 : f32 to vector<128x128xf32>
      %20 = arith.maximumf %18, %19 : vector<128x128xf32>
      %c0_18 = arith.constant 0 : index
      %c0_19 = arith.constant 0 : index
      %21 = vector.load %arg6[%c0_18, %c0_19] : memref<128x128xf32, #tpu.memory_space<vmem>>, vector<128x128xf32>
      tpu.vector_store %arg6[%c0_18, %c0_19], %20 {strides = array<i32>} : memref<128x128xf32, #tpu.memory_space<vmem>>, vector<128x128xf32>,
    } else {
    }
    return
  }
  func.func @transform_0(%arg0: i32, %arg1: i32) -> (i32, i32) {
    %c0_i32 = arith.constant 0 : i32
    return %arg0, %arg1 : i32, i32
  }
  func.func @transform_1(%arg0: i32, %arg1: i32) -> (i32, i32) {
    %c0_i32 = arith.constant 0 : i32
    %c0_i32_0 = arith.constant 0 : i32
    return %arg1, %c0_i32 : i32, i32
  }
  func.func @transform_2(%arg0: i32, %arg1: i32) -> (i32, i32) {
    %c0_i32 = arith.constant 0 : i32
    %c0_i32_0 = arith.constant 0 : i32
    %c0_i32_1 = arith.constant 0 : i32
    return %c0_i32, %c0_i32_0 : i32, i32
  }
  func.func @transform_3(%arg0: i32, %arg1: i32) -> (i32, i32) {
    %c0_i32 = arith.constant 0 : i32
    %c0_i32_0 = arith.constant 0 : i32
    %c0_i32_1 = arith.constant 0 : i32
    return %c0_i32, %c0_i32_0 : i32, i32
  }
  func.func @transform_4(%arg0: i32, %arg1: i32) -> (i32, i32) {
    %c0_i32 = arith.constant 0 : i32
    %c0_i32_0 = arith.constant 0 : i32
    return %arg0, %c0_i32 : i32, i32
  }
}

</mosaic_0001>

<llo_original>
// kernel: encoder_forward.2
$region0: #{encoder_forward.2}
  #allocation0 [shape = 'u32[]', space=smem, size = 0x4, offset = 0x4, fixed_abs, tag = 'smem constant byte address 0x4 - core index']
  #allocation1 [shape = 'u32[72,128]{1,0:T(1,128)}', space=vmem, size = 0x9000, scoped, tag = 'internal scratch']
  #allocation2 [shape = 'f32[128,128]{1,0:T(8,128)}', space=vmem, size = 0x10000, scoped, tag = 'scratch operand']
  %s0 = inlined_call_operand.vmem [shape: bf16[128,128], index: 0, kind: input, shape index: {}]
  %s1 = inlined_call_operand.vmem [shape: bf16[128,128], index: 1, kind: input, shape index: {}]
  %s2 = inlined_call_operand.vmem [shape: bf16[128,128], index: 2, kind: input, shape index: {}]
  %s3 = inlined_call_operand.vmem [shape: f32[1,128], index: 3, kind: input, shape index: {}]
  %s4 = inlined_call_operand.vmem [shape: f32[128,128], index: 4, kind: output, shape index: {}]
  %s5 = sld [smem:[#allocation0]]
  $region34: #{encoder_forward.2} parent=0
    _
  %s7 = ssub.s32 1, %s5
  %s8 = scalar_select 0, %s7, %s5
  // Predicated region
  $region2: #{encoder_forward.2} parent=0 // pred_check
    _
  $region3: #{encoder_forward.2} parent=0 // pred_check_branch
    %10 = sbr.rel (0) target = $region5
  $region4: #{encoder_forward.2} parent=0 // pred_region
    _
  $region5: #{encoder_forward.2} parent=0 // pred_fallthru
    _
  // Predicated region
  $region6: #{encoder_forward.2} parent=0 // pred_check
    _
  $region7: #{encoder_forward.2} parent=0 // pred_check_branch
    %12 = sbr.rel (0) target = $region9
  $region8: #{encoder_forward.2} parent=0 // pred_region
    _
  $region9: #{encoder_forward.2} parent=0 // pred_fallthru
    _
  // Predicated region
  $region10: #{encoder_forward.2} parent=0 // pred_check
    _
  $region11: #{encoder_forward.2} parent=0 // pred_check_branch
    %14 = sbr.rel (0) target = $region13
  $region12: #{encoder_forward.2} parent=0 // pred_region
    _
  $region13: #{encoder_forward.2} parent=0 // pred_fallthru
    _
  // Predicated region
  $region14: #{encoder_forward.2} parent=0 // pred_check
    _
  $region15: #{encoder_forward.2} parent=0 // pred_check_branch
    %16 = sbr.rel (0) target = $region17
  $region16: #{encoder_forward.2} parent=0 // pred_region
    _
  $region17: #{encoder_forward.2} parent=0 // pred_fallthru
    _
  %p17 = scmp.eq.s32.totalorder 0, 0
  // Predicated region
  $region18: #{encoder_forward.2} parent=0 // pred_check
    %p18 = pneg %p17
  $region19: #{encoder_forward.2} parent=0 // pred_check_branch
    %20 = sbr.rel (%p18) target = $region21
  $region20: #{encoder_forward.2} parent=0 // pred_region
    %21 = vst [vmem:[#allocation2] sm:$0xff] 0.0
    %22 = vst [vmem:[#allocation2 + $0x8] sm:$0xff] 0.0
    %23 = vst [vmem:[#allocation2 + $0x10] sm:$0xff] 0.0
    %24 = vst [vmem:[#allocation2 + $0x18] sm:$0xff] 0.0
    %25 = vst [vmem:[#allocation2 + $0x20] sm:$0xff] 0.0
    %26 = vst [vmem:[#allocation2 + $0x28] sm:$0xff] 0.0
    %27 = vst [vmem:[#allocation2 + $0x30] sm:$0xff] 0.0
    %28 = vst [vmem:[#allocation2 + $0x38] sm:$0xff] 0.0
    %29 = vst [vmem:[#allocation2 + $0x40] sm:$0xff] 0.0
    %30 = vst [vmem:[#allocation2 + $0x48] sm:$0xff] 0.0
    %31 = vst [vmem:[#allocation2 + $0x50] sm:$0xff] 0.0
    %32 = vst [vmem:[#allocation2 + $0x58] sm:$0xff] 0.0
    %33 = vst [vmem:[#allocation2 + $0x60] sm:$0xff] 0.0
    %34 = vst [vmem:[#allocation2 + $0x68] sm:$0xff] 0.0
    %35 = vst [vmem:[#allocation2 + $0x70] sm:$0xff] 0.0
    %36 = vst [vmem:[#allocation2 + $0x78] sm:$0xff] 0.0
  $region21: #{encoder_forward.2} parent=0 // pred_fallthru
    _
  %v37 = vld [vmem:[%s1] sm:$0xf]
  %v38 = vld [vmem:[%s1 + $0x4] sm:$0xf]
  %v39 = vld [vmem:[%s1 + $0x8] sm:$0xf]
  %v40 = vld [vmem:[%s1 + $0xc] sm:$0xf]
  %v41 = vld [vmem:[%s1 + $0x10] sm:$0xf]
  %v42 = vld [vmem:[%s1 + $0x14] sm:$0xf]
  %v43 = vld [vmem:[%s1 + $0x18] sm:$0xf]
  %v44 = vld [vmem:[%s1 + $0x1c] sm:$0xf]
  %v45 = vld [vmem:[%s1 + $0x20] sm:$0xf]
  %v46 = vld [vmem:[%s1 + $0x24] sm:$0xf]
  %v47 = vld [vmem:[%s1 + $0x28] sm:$0xf]
  %v48 = vld [vmem:[%s1 + $0x2c] sm:$0xf]
  %v49 = vld [vmem:[%s1 + $0x30] sm:$0xf]
  %v50 = vld [vmem:[%s1 + $0x34] sm:$0xf]
  %v51 = vld [vmem:[%s1 + $0x38] sm:$0xf]
  %v52 = vld [vmem:[%s1 + $0x3c] sm:$0xf]
  %v53 = vld [vmem:[%s2] sm:$0xf]
  %v54 = vld [vmem:[%s2 + $0x4] sm:$0xf]
  %v55 = vld [vmem:[%s2 + $0x8] sm:$0xf]
  %v56 = vld [vmem:[%s2 + $0xc] sm:$0xf]
  %v57 = vld [vmem:[%s2 + $0x10] sm:$0xf]
  %v58 = vld [vmem:[%s2 + $0x14] sm:$0xf]
  %v59 = vld [vmem:[%s2 + $0x18] sm:$0xf]
  %v60 = vld [vmem:[%s2 + $0x1c] sm:$0xf]
  %v61 = vld [vmem:[%s2 + $0x20] sm:$0xf]
  %v62 = vld [vmem:[%s2 + $0x24] sm:$0xf]
  %v63 = vld [vmem:[%s2 + $0x28] sm:$0xf]
  %v64 = vld [vmem:[%s2 + $0x2c] sm:$0xf]
  %v65 = vld [vmem:[%s2 + $0x30] sm:$0xf]
  %v66 = vld [vmem:[%s2 + $0x34] sm:$0xf]
  %v67 = vld [vmem:[%s2 + $0x38] sm:$0xf]
  %v68 = vld [vmem:[%s2 + $0x3c] sm:$0xf]
  %v85 = vunpack.c.l.b16 %v37
  %v86 = vunpack.c.l.b16 %v38
  %v87 = vunpack.c.l.b16 %v39
  %v88 = vunpack.c.l.b16 %v40
  %v89 = vunpack.c.l.b16 %v41
  %v90 = vunpack.c.l.b16 %v42
  %v91 = vunpack.c.l.b16 %v43
  %v92 = vunpack.c.l.b16 %v44
  %v93 = vunpack.c.l.b16 %v45
  %v94 = vunpack.c.l.b16 %v46
  %v95 = vunpack.c.l.b16 %v47
  %v96 = vunpack.c.l.b16 %v48
  %v97 = vunpack.c.l.b16 %v49
  %v98 = vunpack.c.l.b16 %v50
  %v99 = vunpack.c.l.b16 %v51
  %v100 = vunpack.c.l.b16 %v52
  %v101 = vpack.c.b16 %v86, %v85
  %v102 = vpack.c.b16 %v88, %v87
  %v103 = vpack.c.b16 %v90, %v89
  %v104 = vpack.c.b16 %v92, %v91
  %v105 = vpack.c.b16 %v94, %v93
  %v106 = vpack.c.b16 %v96, %v95
  %v107 = vpack.c.b16 %v98, %v97
  %v108 = vpack.c.b16 %v100, %v99
  %v133 = vunpack.c.l.b16 %v53
  %v134 = vunpack.c.l.b16 %v54
  %v135 = vunpack.c.l.b16 %v55
  %v136 = vunpack.c.l.b16 %v56
  %v137 = vunpack.c.l.b16 %v57
  %v138 = vunpack.c.l.b16 %v58
  %v139 = vunpack.c.l.b16 %v59
  %v140 = vunpack.c.l.b16 %v60
  %v141 = vunpack.c.l.b16 %v61
  %v142 = vunpack.c.l.b16 %v62
  %v143 = vunpack.c.l.b16 %v63
  %v144 = vunpack.c.l.b16 %v64
  %v145 = vunpack.c.l.b16 %v65
  %v146 = vunpack.c.l.b16 %v66
  %v147 = vunpack.c.l.b16 %v67
  %v148 = vunpack.c.l.b16 %v68
  %v149 = vpack.c.b16 %v134, %v133
  %v150 = vpack.c.b16 %v136, %v135
  %v151 = vpack.c.b16 %v138, %v137
  %v152 = vpack.c.b16 %v140, %v139
  %v153 = vpack.c.b16 %v142, %v141
  %v154 = vpack.c.b16 %v144, %v143
  %v155 = vpack.c.b16 %v146, %v145
  %v156 = vpack.c.b16 %v148, %v147
  %165 = vmatpush.bf16.msra.mxu0 %v156
  %166 = vmatpush.bf16.msra.mxu0 %v155
  %167 = vmatpush.bf16.msra.mxu0 %v154
  %168 = vmatpush.bf16.msra.mxu0 %v153
  %169 = vmatpush.bf16.msra.mxu0 %v152
  %170 = vmatpush.bf16.msra.mxu0 %v151
  %171 = vmatpush.bf16.msra.mxu0 %v150
  %172 = vmatpush.bf16.msra.mxu0 %v149
  %173 = vmatmul.bf16.gmra.mxu0 %v101
  %v174 = vpop.f32.mrf.mxu0
  %v175 = vadd.f32 0.0, %v174
  %v176 = vpop.f32.mrf.mxu0
  %v177 = vadd.f32 0.0, %v176
  %178 = vmatmul.bf16.gmra.mxu0 %v102
  %v179 = vpop.f32.mrf.mxu0
  %v180 = vadd.f32 0.0, %v179
  %v181 = vpop.f32.mrf.mxu0
  %v182 = vadd.f32 0.0, %v181
  %183 = vmatmul.bf16.gmra.mxu0 %v103
  %v184 = vpop.f32.mrf.mxu0
  %v185 = vadd.f32 0.0, %v184
  %v186 = vpop.f32.mrf.mxu0
  %v187 = vadd.f32 0.0, %v186
  %188 = vmatmul.bf16.gmra.mxu0 %v104
  %v189 = vpop.f32.mrf.mxu0
  %v190 = vadd.f32 0.0, %v189
  %v191 = vpop.f32.mrf.mxu0
  %v192 = vadd.f32 0.0, %v191
  %193 = vmatmul.bf16.gmra.mxu0 %v105
  %v194 = vpop.f32.mrf.mxu0
  %v195 = vadd.f32 0.0, %v194
  %v196 = vpop.f32.mrf.mxu0
  %v197 = vadd.f32 0.0, %v196
  %198 = vmatmul.bf16.gmra.mxu0 %v106
  %v199 = vpop.f32.mrf.mxu0
  %v200 = vadd.f32 0.0, %v199
  %v201 = vpop.f32.mrf.mxu0
  %v202 = vadd.f32 0.0, %v201
  %203 = vmatmul.bf16.gmra.mxu0 %v107
  %v204 = vpop.f32.mrf.mxu0
  %v205 = vadd.f32 0.0, %v204
  %v206 = vpop.f32.mrf.mxu0
  %v207 = vadd.f32 0.0, %v206
  %208 = vmatmul.bf16.gmra.mxu0 %v108
  %v209 = vpop.f32.mrf.mxu0
  %v210 = vadd.f32 0.0, %v209
  %v211 = vpop.f32.mrf.mxu0
  %v212 = vadd.f32 0.0, %v211
  %213 = vdwg.mxu0
  %v214 = vld [vmem:[#allocation2] sm:$0xff]
  %v215 = vld [vmem:[#allocation2 + $0x8] sm:$0xff]
  %v216 = vld [vmem:[#allocation2 + $0x10] sm:$0xff]
  %v217 = vld [vmem:[#allocation2 + $0x18] sm:$0xff]
  %v218 = vld [vmem:[#allocation2 + $0x20] sm:$0xff]
  %v219 = vld [vmem:[#allocation2 + $0x28] sm:$0xff]
  %v220 = vld [vmem:[#allocation2 + $0x30] sm:$0xff]
  %v221 = vld [vmem:[#allocation2 + $0x38] sm:$0xff]
  %v222 = vld [vmem:[#allocation2 + $0x40] sm:$0xff]
  %v223 = vld [vmem:[#allocation2 + $0x48] sm:$0xff]
  %v224 = vld [vmem:[#allocation2 + $0x50] sm:$0xff]
  %v225 = vld [vmem:[#allocation2 + $0x58] sm:$0xff]
  %v226 = vld [vmem:[#allocation2 + $0x60] sm:$0xff]
  %v227 = vld [vmem:[#allocation2 + $0x68] sm:$0xff]
  %v228 = vld [vmem:[#allocation2 + $0x70] sm:$0xff]
  %v229 = vld [vmem:[#allocation2 + $0x78] sm:$0xff]
  %v230 = vld [vmem:[%s0] sm:$0xf]
  %v231 = vld [vmem:[%s0 + $0x4] sm:$0xf]
  %v232 = vld [vmem:[%s0 + $0x8] sm:$0xf]
  %v233 = vld [vmem:[%s0 + $0xc] sm:$0xf]
  %v234 = vld [vmem:[%s0 + $0x10] sm:$0xf]
  %v235 = vld [vmem:[%s0 + $0x14] sm:$0xf]
  %v236 = vld [vmem:[%s0 + $0x18] sm:$0xf]
  %v237 = vld [vmem:[%s0 + $0x1c] sm:$0xf]
  %v238 = vld [vmem:[%s0 + $0x20] sm:$0xf]
  %v239 = vld [vmem:[%s0 + $0x24] sm:$0xf]
  %v240 = vld [vmem:[%s0 + $0x28] sm:$0xf]
  %v241 = vld [vmem:[%s0 + $0x2c] sm:$0xf]
  %v242 = vld [vmem:[%s0 + $0x30] sm:$0xf]
  %v243 = vld [vmem:[%s0 + $0x34] sm:$0xf]
  %v244 = vld [vmem:[%s0 + $0x38] sm:$0xf]
  %v245 = vld [vmem:[%s0 + $0x3c] sm:$0xf]
  %v246 = vpack.c.bf16 %v177, %v175
  %v247 = vpack.c.bf16 %v182, %v180
  %v248 = vpack.c.bf16 %v187, %v185
  %v249 = vpack.c.bf16 %v192, %v190
  %v250 = vpack.c.bf16 %v197, %v195
  %v251 = vpack.c.bf16 %v202, %v200
  %v252 = vpack.c.bf16 %v207, %v205
  %v253 = vpack.c.bf16 %v212, %v210
  %v270 = vunpack.c.l.b16 %v230
  %v271 = vunpack.c.l.b16 %v231
  %v272 = vunpack.c.l.b16 %v232
  %v273 = vunpack.c.l.b16 %v233
  %v274 = vunpack.c.l.b16 %v234
  %v275 = vunpack.c.l.b16 %v235
  %v276 = vunpack.c.l.b16 %v236
  %v277 = vunpack.c.l.b16 %v237
  %v278 = vunpack.c.l.b16 %v238
  %v279 = vunpack.c.l.b16 %v239
  %v280 = vunpack.c.l.b16 %v240
  %v281 = vunpack.c.l.b16 %v241
  %v282 = vunpack.c.l.b16 %v242
  %v283 = vunpack.c.l.b16 %v243
  %v284 = vunpack.c.l.b16 %v244
  %v285 = vunpack.c.l.b16 %v245
  %v286 = vpack.c.b16 %v271, %v270
  %v287 = vpack.c.b16 %v273, %v272
  %v288 = vpack.c.b16 %v275, %v274
  %v289 = vpack.c.b16 %v277, %v276
  %v290 = vpack.c.b16 %v279, %v278
  %v291 = vpack.c.b16 %v281, %v280
  %v292 = vpack.c.b16 %v283, %v282
  %v293 = vpack.c.b16 %v285, %v284
  %302 = vmatpush.bf16.msra.mxu0 %v253
  %303 = vmatpush.bf16.msra.mxu0 %v252
  %304 = vmatpush.bf16.msra.mxu0 %v251
  %305 = vmatpush.bf16.msra.mxu0 %v250
  %306 = vmatpush.bf16.msra.mxu0 %v249
  %307 = vmatpush.bf16.msra.mxu0 %v248
  %308 = vmatpush.bf16.msra.mxu0 %v247
  %309 = vmatpush.bf16.msra.mxu0 %v246
  %310 = vmatmul.bf16.gmra.mxu0 %v286
  %v311 = vpop.f32.mrf.mxu0
  %v312 = vadd.f32 0.0, %v311
  %v313 = vpop.f32.mrf.mxu0
  %v314 = vadd.f32 0.0, %v313
  %315 = vmatmul.bf16.gmra.mxu0 %v287
  %v316 = vpop.f32.mrf.mxu0
  %v317 = vadd.f32 0.0, %v316
  %v318 = vpop.f32.mrf.mxu0
  %v319 = vadd.f32 0.0, %v318
  %320 = vmatmul.bf16.gmra.mxu0 %v288
  %v321 = vpop.f32.mrf.mxu0
  %v322 = vadd.f32 0.0, %v321
  %v323 = vpop.f32.mrf.mxu0
  %v324 = vadd.f32 0.0, %v323
  %325 = vmatmul.bf16.gmra.mxu0 %v289
  %v326 = vpop.f32.mrf.mxu0
  %v327 = vadd.f32 0.0, %v326
  %v328 = vpop.f32.mrf.mxu0
  %v329 = vadd.f32 0.0, %v328
  %330 = vmatmul.bf16.gmra.mxu0 %v290
  %v331 = vpop.f32.mrf.mxu0
  %v332 = vadd.f32 0.0, %v331
  %v333 = vpop.f32.mrf.mxu0
  %v334 = vadd.f32 0.0, %v333
  %335 = vmatmul.bf16.gmra.mxu0 %v291
  %v336 = vpop.f32.mrf.mxu0
  %v337 = vadd.f32 0.0, %v336
  %v338 = vpop.f32.mrf.mxu0
  %v339 = vadd.f32 0.0, %v338
  %340 = vmatmul.bf16.gmra.mxu0 %v292
  %v341 = vpop.f32.mrf.mxu0
  %v342 = vadd.f32 0.0, %v341
  %v343 = vpop.f32.mrf.mxu0
  %v344 = vadd.f32 0.0, %v343
  %345 = vmatmul.bf16.gmra.mxu0 %v293
  %v346 = vpop.f32.mrf.mxu0
  %v347 = vadd.f32 0.0, %v346
  %v348 = vpop.f32.mrf.mxu0
  %v349 = vadd.f32 0.0, %v348
  %350 = vdwg.mxu0
  %v351 = vadd.f32 %v214, %v312
  %v352 = vadd.f32 %v215, %v314
  %v353 = vadd.f32 %v216, %v317
  %v354 = vadd.f32 %v217, %v319
  %v355 = vadd.f32 %v218, %v322
  %v356 = vadd.f32 %v219, %v324
  %v357 = vadd.f32 %v220, %v327
  %v358 = vadd.f32 %v221, %v329
  %v359 = vadd.f32 %v222, %v332
  %v360 = vadd.f32 %v223, %v334
  %v361 = vadd.f32 %v224, %v337
  %v362 = vadd.f32 %v225, %v339
  %v363 = vadd.f32 %v226, %v342
  %v364 = vadd.f32 %v227, %v344
  %v365 = vadd.f32 %v228, %v347
  %v366 = vadd.f32 %v229, %v349
  %367 = vst [vmem:[#allocation2] sm:$0xff] %v351
  %368 = vst [vmem:[#allocation2 + $0x8] sm:$0xff] %v352
  %369 = vst [vmem:[#allocation2 + $0x10] sm:$0xff] %v353
  %370 = vst [vmem:[#allocation2 + $0x18] sm:$0xff] %v354
  %371 = vst [vmem:[#allocation2 + $0x20] sm:$0xff] %v355
  %372 = vst [vmem:[#allocation2 + $0x28] sm:$0xff] %v356
  %373 = vst [vmem:[#allocation2 + $0x30] sm:$0xff] %v357
  %374 = vst [vmem:[#allocation2 + $0x38] sm:$0xff] %v358
  %375 = vst [vmem:[#allocation2 + $0x40] sm:$0xff] %v359
  %376 = vst [vmem:[#allocation2 + $0x48] sm:$0xff] %v360
  %377 = vst [vmem:[#allocation2 + $0x50] sm:$0xff] %v361
  %378 = vst [vmem:[#allocation2 + $0x58] sm:$0xff] %v362
  %379 = vst [vmem:[#allocation2 + $0x60] sm:$0xff] %v363
  %380 = vst [vmem:[#allocation2 + $0x68] sm:$0xff] %v364
  %381 = vst [vmem:[#allocation2 + $0x70] sm:$0xff] %v365
  %382 = vst [vmem:[#allocation2 + $0x78] sm:$0xff] %v366
  // Predicated region
  $region22: #{encoder_forward.2} parent=0 // pred_check
    %p383 = pneg %p17
  $region23: #{encoder_forward.2} parent=0 // pred_check_branch
    %385 = sbr.rel (%p383) target = $region25
  $region24: #{encoder_forward.2} parent=0 // pred_region
    %v386 = vld [vmem:[#allocation2] sm:$0xff]
    %v387 = vld [vmem:[#allocation2 + $0x8] sm:$0xff]
    %v388 = vld [vmem:[#allocation2 + $0x10] sm:$0xff]
    %v389 = vld [vmem:[#allocation2 + $0x18] sm:$0xff]
    %v390 = vld [vmem:[#allocation2 + $0x20] sm:$0xff]
    %v391 = vld [vmem:[#allocation2 + $0x28] sm:$0xff]
    %v392 = vld [vmem:[#allocation2 + $0x30] sm:$0xff]
    %v393 = vld [vmem:[#allocation2 + $0x38] sm:$0xff]
    %v394 = vld [vmem:[#allocation2 + $0x40] sm:$0xff]
    %v395 = vld [vmem:[#allocation2 + $0x48] sm:$0xff]
    %v396 = vld [vmem:[#allocation2 + $0x50] sm:$0xff]
    %v397 = vld [vmem:[#allocation2 + $0x58] sm:$0xff]
    %v398 = vld [vmem:[#allocation2 + $0x60] sm:$0xff]
    %v399 = vld [vmem:[#allocation2 + $0x68] sm:$0xff]
    %v400 = vld [vmem:[#allocation2 + $0x70] sm:$0xff]
    %v401 = vld [vmem:[#allocation2 + $0x78] sm:$0xff]
    %v402 = vld [vmem:[%s3] sm:$0x1]
    %v404 = vperm.slane %v402, 0
    %v406 = vadd.f32 %v386, %v404
    %v407 = vadd.f32 %v387, %v404
    %v408 = vadd.f32 %v388, %v404
    %v409 = vadd.f32 %v389, %v404
    %v410 = vadd.f32 %v390, %v404
    %v411 = vadd.f32 %v391, %v404
    %v412 = vadd.f32 %v392, %v404
    %v413 = vadd.f32 %v393, %v404
    %v414 = vadd.f32 %v394, %v404
    %v415 = vadd.f32 %v395, %v404
    %v416 = vadd.f32 %v396, %v404
    %v417 = vadd.f32 %v397, %v404
    %v418 = vadd.f32 %v398, %v404
    %v419 = vadd.f32 %v399, %v404
    %v420 = vadd.f32 %v400, %v404
    %v421 = vadd.f32 %v401, %v404
    %v422 = vmax.f32 %v406, 0.0
    %v423 = vmax.f32 %v407, 0.0
    %v424 = vmax.f32 %v408, 0.0
    %v425 = vmax.f32 %v409, 0.0
    %v426 = vmax.f32 %v410, 0.0
    %v427 = vmax.f32 %v411, 0.0
    %v428 = vmax.f32 %v412, 0.0
    %v429 = vmax.f32 %v413, 0.0
    %v430 = vmax.f32 %v414, 0.0
    %v431 = vmax.f32 %v415, 0.0
    %v432 = vmax.f32 %v416, 0.0
    %v433 = vmax.f32 %v417, 0.0
    %v434 = vmax.f32 %v418, 0.0
    %v435 = vmax.f32 %v419, 0.0
    %v436 = vmax.f32 %v420, 0.0
    %v437 = vmax.f32 %v421, 0.0
    %438 = vst [vmem:[%s4] sm:$0xff] %v422
    %439 = vst [vmem:[%s4 + $0x8] sm:$0xff] %v423
    %440 = vst [vmem:[%s4 + $0x10] sm:$0xff] %v424
    %441 = vst [vmem:[%s4 + $0x18] sm:$0xff] %v425
    %442 = vst [vmem:[%s4 + $0x20] sm:$0xff] %v426
    %443 = vst [vmem:[%s4 + $0x28] sm:$0xff] %v427
    %444 = vst [vmem:[%s4 + $0x30] sm:$0xff] %v428
    %445 = vst [vmem:[%s4 + $0x38] sm:$0xff] %v429
    %446 = vst [vmem:[%s4 + $0x40] sm:$0xff] %v430
    %447 = vst [vmem:[%s4 + $0x48] sm:$0xff] %v431
    %448 = vst [vmem:[%s4 + $0x50] sm:$0xff] %v432
    %449 = vst [vmem:[%s4 + $0x58] sm:$0xff] %v433
    %450 = vst [vmem:[%s4 + $0x60] sm:$0xff] %v434
    %451 = vst [vmem:[%s4 + $0x68] sm:$0xff] %v435
    %452 = vst [vmem:[%s4 + $0x70] sm:$0xff] %v436
    %453 = vst [vmem:[%s4 + $0x78] sm:$0xff] %v437
  $region25: #{encoder_forward.2} parent=0 // pred_fallthru
    _
  // Predicated region
  $region26: #{encoder_forward.2} parent=0 // pred_check
    _
  $region27: #{encoder_forward.2} parent=0 // pred_check_branch
    %455 = sbr.rel (0) target = $region29
  $region28: #{encoder_forward.2} parent=0 // pred_region
    _
  $region29: #{encoder_forward.2} parent=0 // pred_fallthru
    _
  // Predicated region
  $region30: #{encoder_forward.2} parent=0 // pred_check
    _
  $region31: #{encoder_forward.2} parent=0 // pred_check_branch
    %457 = sbr.rel (0) target = $region33
  $region32: #{encoder_forward.2} parent=0 // pred_region
    _
  $region33: #{encoder_forward.2} parent=0 // pred_fallthru
    _

</llo_original>
